<compile_context>
chip_gen: v5e
topology: v5e:2x2
jax: 0.10.0
libtpu: 0.0.40
codegen_flags: <defaults>
</compile_context>

<pallas_src>
import math

import jax
import jax.numpy as jnp
from jax.experimental import pallas as pl
from jax.experimental.pallas import tpu as pltpu


# ----------------------------- Pallas kernel --------------------------------

def _up_kernel(x1_ref, w_ref, b_ref, x2_ref, o_ref):
    """One row-tile of fused ConvTranspose2d(2, stride=2) + bias + skip add.

    x1_ref : (TP, Cin)            input pixels, channels-last (f32 or bf16)
    w_ref  : (2, Cin, 2*Cout)     bf16 weights, [kh, ci, (kw, co)]
    b_ref  : (1, 2*Cout)          f32 bias tiled over kw
    x2_ref : (TH, 2, W, 2*Cout)   skip tensor in the interleaved output view
    o_ref  : (TH, 2, W, 2*Cout)   output, same view  (axes: row, kh, col, (kw, co))
    """
    TH, _, W, C2 = o_ref.shape
    x = x1_ref[...]
    if x.dtype != jnp.bfloat16:
        x = x.astype(jnp.bfloat16)          # VPU cast, avoids a boundary pass
    b = b_ref[...]                          # (1, 2*Cout) f32
    for kh in range(2):                     # static, unrolled
        # MXU matmul with f32 accumulation.
        y = jnp.dot(x, w_ref[kh], preferred_element_type=jnp.float32)  # (TP, C2)
        # Split pixel rows back into (TH, W); lane dim (2*Cout) unchanged => free.
        y = y.reshape(TH, W, C2) + b + x2_ref[:, kh, :, :].astype(jnp.float32)
        o_ref[:, kh, :, :] = y.astype(o_ref.dtype)


# ----------------------------- Tiling helpers --------------------------------

def _vmem_budgets():
    """Generation-aware VMEM budgets (v7x: 64 MiB per core, v5e/v6e: 128 MiB)."""
    try:
        cap = int(pltpu.get_tpu_info().vmem_capacity_bytes)
    except Exception:
        cap = 64 << 20                                  # conservative (v7x-sized)
    tile_budget = min(int(cap * 0.45), 64 << 20)        # what the picker may fill
    vmem_limit = min(int(cap * 0.62), 96 << 20)         # Mosaic scoped-VMEM limit
    return tile_budget, vmem_limit


def _pick_tile_rows(R, W, Cin, Cout, x1_bytes, skip_bytes, out_bytes,
                    max_pixels, vmem_budget):
    """Pick rows-per-tile TH (and row padding) for a 1-D grid over R = N*H rows.

    Constraints: TP = TH*W must be a multiple of 8 (sublane rule for the
    (TP, Cin) x1 block), TP <= max_pixels, and the double-buffered tiles must
    fit `vmem_budget`.  Prefers divisors of R (no padding) and enough grid
    steps to keep both v7x TensorCores busy / the DMA pipeline full.
    """
    q = 8 // math.gcd(W, 8)                 # TH % q == 0  <=>  TH*W % 8 == 0

    def tile_bytes(th):
        tp = th * W
        return (2 * tp * Cin * x1_bytes              # x1 tile, double-buffered
                + 2 * tp * 4 * Cout * skip_bytes     # skip tile
                + 2 * tp * 4 * Cout * out_bytes      # output tile
                + 2 * 2 * Cin * 2 * Cout * 2         # resident bf16 weights
                + 2 * 4 * 2 * Cout)                  # bias

    cands = [th for th in range(1, R + 1)
             if R % th == 0 and th % q == 0 and th * W <= max_pixels
             and tile_bytes(th) <= vmem_budget]
    if cands:
        # Prefer >= 8 grid steps with a healthy tile, then >= 2 steps
        # (two v7x TensorCores), then the largest tile that fits.
        for min_steps, min_tp in ((8, 512), (2, 8), (1, 1)):
            ok = [th for th in cands if R // th >= min_steps and th * W >= min_tp]
            if ok:
                return max(ok), 0
    # Fallback: pad R up to a multiple of TH (prime R, odd W, tiny inputs, ...).
    th = max(q, (max_pixels // W) // q * q) if W <= max_pixels else q
    while th > q and tile_bytes(th) > vmem_budget:
        th -= q
    th = max(th, q)
    pad = (-R) % th
    return th, pad


# ----------------------------- Core implementation ---------------------------

def _up_nhwc_impl(x1_nhwc, x2_nhwc, w, b, *, skip_dtype, out_dtype,
                  allow_input_fusion):
    """Channels-last core: x1 (N,H,W,Cin), x2 (N,2H,2W,Cout) -> (N,2H,2W,Cout)."""
    N, H, W, Cin = x1_nhwc.shape
    Cout = w.shape[1]
    # F.pad in the reference is the identity when x2 is exactly 2x the size.
    assert x2_nhwc.shape == (N, 2 * H, 2 * W, Cout), x2_nhwc.shape
    # TODO(synk): general F.pad path for odd size mismatches between x2 and up(x1).

    R = N * H                                            # fold batch into rows
    x1_rows = x1_nhwc.reshape(R * W, Cin)                # free view
    x2_view = x2_nhwc.astype(skip_dtype).reshape(R, 2, W, 2 * Cout)  # free view

    # ConvTranspose weight (ci, co, kh, kw) -> (kh, ci, (kw, co)) columns.
    w_r = (jnp.transpose(w, (2, 0, 3, 1))
           .reshape(2, Cin, 2 * Cout)
           .astype(jnp.bfloat16))
    b_r = jnp.tile(b.astype(jnp.float32), 2).reshape(1, 2 * Cout)   # per (kw, co)

    tile_budget, vmem_limit = _vmem_budgets()
    TH, pad = _pick_tile_rows(
        R, W, Cin, Cout,
        x1_bytes=x1_rows.dtype.itemsize,
        skip_bytes=jnp.dtype(skip_dtype).itemsize,
        out_bytes=jnp.dtype(out_dtype).itemsize,
        max_pixels=4096, vmem_budget=tile_budget)
    if pad:
        x1_rows = jnp.pad(x1_rows, ((0, pad * W), (0, 0)))
        x2_view = jnp.pad(x2_view, ((0, pad), (0, 0), (0, 0), (0, 0)))
    Rp = R + pad
    TP = TH * W
    grid = (Rp // TH,)

    cost = pl.CostEstimate(
        flops=2 * N * H * W * Cin * 4 * Cout,
        transcendentals=0,
        bytes_accessed=(x1_rows.size * x1_rows.dtype.itemsize
                        + x2_view.size * jnp.dtype(skip_dtype).itemsize
                        + Rp * 2 * W * 2 * Cout * jnp.dtype(out_dtype).itemsize
                        + w_r.size * 2 + b_r.size * 4))

    out = pl.pallas_call(
        _up_kernel,
        out_shape=jax.ShapeDtypeStruct((Rp, 2, W, 2 * Cout), out_dtype),
        grid=grid,
        in_specs=[
            pl.BlockSpec((TP, Cin), lambda t: (t, 0)),
            pl.BlockSpec((2, Cin, 2 * Cout), lambda t: (0, 0, 0)),
            pl.BlockSpec((1, 2 * Cout), lambda t: (0, 0)),
            pl.BlockSpec((TH, 2, W, 2 * Cout), lambda t: (t, 0, 0, 0)),
        ],
        out_specs=pl.BlockSpec((TH, 2, W, 2 * Cout), lambda t: (t, 0, 0, 0)),
        compiler_params=pltpu.CompilerParams(
            dimension_semantics=("parallel",),
            vmem_limit_bytes=vmem_limit,
            allow_input_fusion=allow_input_fusion),
        cost_estimate=cost,
    )(x1_rows, w_r, b_r, x2_view)

    out = out[:R].reshape(N, 2 * H, 2 * W, Cout)          # drop row padding; free view
    return out


# ----------------------------- Public wrappers --------------------------------

def up_forward_nhwc(x1_nhwc, x2_nhwc, w, b, *, skip_dtype=jnp.float32,
                    out_dtype=jnp.float32):
    """Channels-last entry point (preferred): no boundary transposes at all."""
    return _up_nhwc_impl(x1_nhwc, x2_nhwc, w, b, skip_dtype=skip_dtype,
                         out_dtype=out_dtype, allow_input_fusion=None)


def up_forward(x1, x2, w, b, *, skip_dtype=jnp.float32, out_dtype=jnp.float32):
    """PyTorch `up.forward(x1, x2)` with NCHW tensors (module-compatible).

    x1: (N, Cin, H, W)   x2: (N, Cin//2, 2H, 2W)
    w : (Cin, Cout, 2, 2) (PyTorch ConvTranspose2d layout)   b: (Cout,)
    returns (N, Cout, 2H, 2W), dtype `out_dtype` (f32 by default, like the ref).
    """
    N, Cin, H, W = x1.shape
    Cout = w.shape[1]
    assert x2.shape == (N, Cout, 2 * H, 2 * W), x2.shape
    x1_nhwc = jnp.transpose(x1, (0, 2, 3, 1))
    x2_nhwc = jnp.transpose(x2, (0, 2, 3, 1))
    # allow_input_fusion lets XLA fuse the NCHW->NHWC transposes into the
    # pallas operand reads (one bool per pallas_call input: x1, w, b, x2).
    out = _up_nhwc_impl(x1_nhwc, x2_nhwc, w, b, skip_dtype=skip_dtype,
                        out_dtype=out_dtype,
                        allow_input_fusion=[True, False, False, True])
    return jnp.transpose(out, (0, 3, 1, 2))               # NHWC -> NCHW


# ----------------------------- Pure-JAX reference ----------------------------

def up_reference(x1, x2, w, b):
    """Reference ConvTranspose2d(2, stride=2) + add, with bf16-rounded matmul
    operands to mirror the kernel's MXU precision."""
    x1f = x1.astype(jnp.bfloat16).astype(jnp.float32)
    wf = w.astype(jnp.bfloat16).astype(jnp.float32)
    y = jnp.einsum('nihw,iokl->nohwkl', x1f, wf)           # (N, Cout, H, W, 2, 2)
    N, Cout, H, W, _, _ = y.shape
    y = y.transpose(0, 1, 2, 4, 3, 5).reshape(N, Cout, 2 * H, 2 * W)
    y = y + b.reshape(1, Cout, 1, 1)
    return x2.astype(jnp.float32) + y


# --------------------------------- Main ---------------------------------------

if __name__ == "__main__":
    in_ch = 256                      # CBDNet up1: ConvTranspose2d(256, 128, 2, 2)
    out_ch = in_ch // 2
    N, H, W = 2, 8, 8                # x1 spatial; x2 is 2H x 2W

    key = jax.random.PRNGKey(0)
    k1, k2, k3, k4 = jax.random.split(key, 4)
    x1 = jax.random.normal(k1, (N, in_ch, H, W), jnp.float32)
    x2 = jax.random.normal(k2, (N, out_ch, 2 * H, 2 * W), jnp.float32)
    w = jax.random.normal(k3, (in_ch, out_ch, 2, 2), jnp.float32) / (2.0 * in_ch ** 0.5)
    b = jax.random.normal(k4, (out_ch,), jnp.float32) * 0.01

    ref = up_reference(x1, x2, w, b)

    # NCHW (module-compatible) path.
    out = jax.jit(up_forward)(x1, x2, w, b)
    jax.block_until_ready(out)
    assert out.shape == (N, out_ch, 2 * H, 2 * W), out.shape
    assert out.dtype == jnp.float32
    err = float(jnp.max(jnp.abs(out - ref)))
    assert err < 5e-2, f"NCHW path max abs error {err}"

    # Channels-last path (no boundary transposes) — preferred inside an NHWC model.
    out_nhwc = jax.jit(up_forward_nhwc)(
        jnp.transpose(x1, (0, 2, 3, 1)), jnp.transpose(x2, (0, 2, 3, 1)), w, b)
    jax.block_until_ready(out_nhwc)
    err2 = float(jnp.max(jnp.abs(jnp.transpose(out_nhwc, (0, 3, 1, 2)) - ref)))
    assert err2 < 5e-2, f"NHWC path max abs error {err2}"

    print("KERNEL_OK")
</pallas_src>

<mosaic_0001>
module attributes {stable_mosaic.version = 11 : i64} {
  func.func @_up_kernel(%arg0: i32, %arg1: memref<64x256xf32, #tpu.memory_space<vmem>>, %arg2: memref<2x256x256xbf16, #tpu.memory_space<vmem>>, %arg3: memref<1x256xf32, #tpu.memory_space<vmem>>, %arg4: memref<8x2x8x256xf32, #tpu.memory_space<vmem>>, %arg5: memref<8x2x8x256xf32, #tpu.memory_space<vmem>>) attributes {dimension_semantics = [#tpu.dimension_semantics<parallel>], iteration_bounds = array<i64: 2>, scalar_prefetch = 0 : i64, scratch_operands = 0 : i64, tpu.core_type = #tpu.core_type<tc>, window_params = [{transform_indices = @transform_0, window_bounds = array<i64: 64, 256>}, {pipeline_mode = #tpu.pipeline_mode<synchronous>, transform_indices = @transform_1, window_bounds = array<i64: 2, 256, 256>}, {pipeline_mode = #tpu.pipeline_mode<synchronous>, transform_indices = @transform_2, window_bounds = array<i64: 1, 256>}, {transform_indices = @transform_3, window_bounds = array<i64: 8, 2, 8, 256>}, {transform_indices = @transform_4, window_bounds = array<i64: 8, 2, 8, 256>}]} {
    %c0 = arith.constant 0 : index
    %c0_0 = arith.constant 0 : index
    %0 = vector.load %arg1[%c0, %c0_0] : memref<64x256xf32, #tpu.memory_space<vmem>>, vector<64x256xf32>
    %1 = arith.truncf %0 : vector<64x256xf32> to vector<64x256xbf16>
    %c0_1 = arith.constant 0 : index
    %c0_2 = arith.constant 0 : index
    %2 = vector.load %arg3[%c0_1, %c0_2] : memref<1x256xf32, #tpu.memory_space<vmem>>, vector<1x256xf32>
    %c0_3 = arith.constant 0 : index
    %c0_4 = arith.constant 0 : index
    %c0_5 = arith.constant 0 : index
    %3 = vector.load %arg2[%c0_3, %c0_4, %c0_5] : memref<2x256x256xbf16, #tpu.memory_space<vmem>>, vector<1x256x256xbf16>
    %4 = vector.shape_cast %3 : vector<1x256x256xbf16> to vector<256x256xbf16>
    %cst = arith.constant dense<0.000000e+00> : vector<64x256xf32>
    %5 = tpu.matmul %1, %4, %cst {dimension_numbers = #tpu.dot_dimension_numbers<[1], [0], [0], [1], [0, 0, 1, 1], [], []>} : vector<64x256xbf16>, vector<256x256xbf16>, vector<64x256xf32> -> vector<64x256xf32>
    %6 = vector.shape_cast %5 : vector<64x256xf32> to vector<8x8x256xf32>
    %7 = vector.shape_cast %2 : vector<1x256xf32> to vector<1x1x256xf32>
    %8 = vector.broadcast %7 : vector<1x1x256xf32> to vector<8x8x256xf32>
    %9 = arith.addf %6, %8 : vector<8x8x256xf32>
    %c0_6 = arith.constant 0 : index
    %c0_7 = arith.constant 0 : index
    %c0_8 = arith.constant 0 : index
    %c0_9 = arith.constant 0 : index
    %10 = vector.load %arg4[%c0_6, %c0_7, %c0_8, %c0_9] : memref<8x2x8x256xf32, #tpu.memory_space<vmem>>, vector<8x1x8x256xf32>
    %11 = vector.shape_cast %10 : vector<8x1x8x256xf32> to vector<8x8x256xf32>
    %12 = arith.addf %9, %11 : vector<8x8x256xf32>
    %c0_10 = arith.constant 0 : index
    %c0_11 = arith.constant 0 : index
    %c0_12 = arith.constant 0 : index
    %c0_13 = arith.constant 0 : index
    %13 = vector.load %arg5[%c0_10, %c0_11, %c0_12, %c0_13] : memref<8x2x8x256xf32, #tpu.memory_space<vmem>>, vector<8x1x8x256xf32>
    %14 = vector.shape_cast %13 : vector<8x1x8x256xf32> to vector<8x8x256xf32>
    %15 = vector.shape_cast %12 : vector<8x8x256xf32> to vector<8x1x8x256xf32>
    tpu.vector_store %arg5[%c0_10, %c0_11, %c0_12, %c0_13], %15 {strides = array<i32>} : memref<8x2x8x256xf32, #tpu.memory_space<vmem>>, vector<8x1x8x256xf32>,
    %c1 = arith.constant 1 : index
    %c0_14 = arith.constant 0 : index
    %c0_15 = arith.constant 0 : index
    %16 = vector.load %arg2[%c1, %c0_14, %c0_15] : memref<2x256x256xbf16, #tpu.memory_space<vmem>>, vector<1x256x256xbf16>
    %17 = vector.shape_cast %16 : vector<1x256x256xbf16> to vector<256x256xbf16>
    %cst_16 = arith.constant dense<0.000000e+00> : vector<64x256xf32>
    %18 = tpu.matmul %1, %17, %cst_16 {dimension_numbers = #tpu.dot_dimension_numbers<[1], [0], [0], [1], [0, 0, 1, 1], [], []>} : vector<64x256xbf16>, vector<256x256xbf16>, vector<64x256xf32> -> vector<64x256xf32>
    %19 = vector.shape_cast %18 : vector<64x256xf32> to vector<8x8x256xf32>
    %20 = vector.shape_cast %2 : vector<1x256xf32> to vector<1x1x256xf32>
    %21 = vector.broadcast %20 : vector<1x1x256xf32> to vector<8x8x256xf32>
    %22 = arith.addf %19, %21 : vector<8x8x256xf32>
    %c0_17 = arith.constant 0 : index
    %c1_18 = arith.constant 1 : index
    %c0_19 = arith.constant 0 : index
    %c0_20 = arith.constant 0 : index
    %23 = vector.load %arg4[%c0_17, %c1_18, %c0_19, %c0_20] : memref<8x2x8x256xf32, #tpu.memory_space<vmem>>, vector<8x1x8x256xf32>
    %24 = vector.shape_cast %23 : vector<8x1x8x256xf32> to vector<8x8x256xf32>
    %25 = arith.addf %22, %24 : vector<8x8x256xf32>
    %c0_21 = arith.constant 0 : index
    %c1_22 = arith.constant 1 : index
    %c0_23 = arith.constant 0 : index
    %c0_24 = arith.constant 0 : index
    %26 = vector.load %arg5[%c0_21, %c1_22, %c0_23, %c0_24] : memref<8x2x8x256xf32, #tpu.memory_space<vmem>>, vector<8x1x8x256xf32>
    %27 = vector.shape_cast %26 : vector<8x1x8x256xf32> to vector<8x8x256xf32>
    %28 = vector.shape_cast %25 : vector<8x8x256xf32> to vector<8x1x8x256xf32>
    tpu.vector_store %arg5[%c0_21, %c1_22, %c0_23, %c0_24], %28 {strides = array<i32>} : memref<8x2x8x256xf32, #tpu.memory_space<vmem>>, vector<8x1x8x256xf32>,
    return
  }
  func.func @transform_0(%arg0: i32) -> (i32, i32) {
    %c0_i32 = arith.constant 0 : i32
    %c0_i32_0 = arith.constant 0 : i32
    return %arg0, %c0_i32 : i32, i32
  }
  func.func @transform_1(%arg0: i32) -> (i32, i32, i32) {
    %c0_i32 = arith.constant 0 : i32
    %c0_i32_0 = arith.constant 0 : i32
    %c0_i32_1 = arith.constant 0 : i32
    %c0_i32_2 = arith.constant 0 : i32
    return %c0_i32, %c0_i32_0, %c0_i32_1 : i32, i32, i32
  }
  func.func @transform_2(%arg0: i32) -> (i32, i32) {
    %c0_i32 = arith.constant 0 : i32
    %c0_i32_0 = arith.constant 0 : i32
    %c0_i32_1 = arith.constant 0 : i32
    return %c0_i32, %c0_i32_0 : i32, i32
  }
  func.func @transform_3(%arg0: i32) -> (i32, i32, i32, i32) {
    %c0_i32 = arith.constant 0 : i32
    %c0_i32_0 = arith.constant 0 : i32
    %c0_i32_1 = arith.constant 0 : i32
    %c0_i32_2 = arith.constant 0 : i32
    return %arg0, %c0_i32, %c0_i32_0, %c0_i32_1 : i32, i32, i32, i32
  }
  func.func @transform_4(%arg0: i32) -> (i32, i32, i32, i32) {
    %c0_i32 = arith.constant 0 : i32
    %c0_i32_0 = arith.constant 0 : i32
    %c0_i32_1 = arith.constant 0 : i32
    %c0_i32_2 = arith.constant 0 : i32
    return %arg0, %c0_i32, %c0_i32_0, %c0_i32_1 : i32, i32, i32, i32
  }
}

</mosaic_0001>

<llo_original>
// kernel: tile.8
$region0: #{tile.8}
  #allocation0 [shape = 's32[1]{0}', space=sflag, size = 0x4, scoped, tag = 'scoped memory for tile.8']
  %s0 = inlined_call_operand.vmem [shape: f32[128], index: 0, kind: input, shape index: {}]
  %s1 = inlined_call_operand.vmem [shape: f32[2,128], index: 1, kind: output, shape index: {}]
  // Predicated region
  $region2: #{tile.8} parent=0 // pred_check
    _
  $region3: #{tile.8} parent=0 // pred_check_branch
    %3 = sbr.rel (0) target = $region5
  $region4: #{tile.8} parent=0 // pred_region
    _
  $region5: #{tile.8} parent=0 // pred_fallthru
    _
  %v4 = vld [vmem:[%s0] ss:$0 sm:$0xff]
  %5 = vst [vmem:[%s1] sm:$0x3] %v4

// kernel: up_forward.1
$region0: #{up_forward.1}
  #allocation0 [shape = 'u32[]', space=smem, size = 0x4, offset = 0x4, fixed_abs, tag = 'smem constant byte address 0x4 - core index']
  #allocation1 [shape = 'u32[72,128]{1,0:T(1,128)}', space=vmem, size = 0x9000, scoped, tag = 'internal scratch']
  %s0 = inlined_call_operand.vmem [shape: f32[128,256], index: 0, kind: input, shape index: {}]
  %s1 = inlined_call_operand.vmem [shape: bf16[2,256,256], index: 1, kind: input, shape index: {}]
  %s2 = inlined_call_operand.vmem [shape: f32[1,256], index: 2, kind: input, shape index: {}]
  %s3 = inlined_call_operand.vmem [shape: f32[16,2,8,256], index: 3, kind: input, shape index: {}]
  %s4 = inlined_call_operand.vmem [shape: f32[16,2,8,256], index: 4, kind: output, shape index: {}]
  %s5 = sld [smem:[#allocation0]]
  $region49: #{up_forward.1} parent=0
    _
  %s7 = ssub.s32 1, %s5
  %s8 = scalar_select 0, %s7, %s5
  loop: start=0, step=1, limit=4
  $region2: #{up_forward.1} parent=0 // loop_pre_header
    _
  $region3: #{up_forward.1} parent=0 // loop_header
    %s10 = sphi 0, %s14
    %p11 = scmp.ge.s32.totalorder %s10, 4
    %s20 = sphi 0, %s22
    %s23 = sphi 0, %s20
    %s24 = sphi 0, %s23
    %s40 = sphi 0, %s24
    %s44 = sphi 0, %s44
    %s46 = sphi 0, %s44
    %s47 = sphi 0, %s46
    %s61 = sphi 0, %s47
    %s65 = sphi 0, %s65
    %s67 = sphi 0, %s65
    %s68 = sphi 0, %s67
    %s82 = sphi 0, %s68
    %s88 = sphi 0, %s90
    %s91 = sphi 0, %s88
    %s92 = sphi 0, %s91
    %s108 = sphi 0, %s92
    %s114 = sphi 0, %s116
    %s117 = sphi 0, %s114
    %s118 = sphi 0, %s117
    %s134 = sphi 0, %s118
  $region4: #{up_forward.1} parent=0 // loop_header_branch
    %13 = sbr.rel (%p11) target = $region8
  $region5: #{up_forward.1} parent=0 // loop_body
    %s15 = ssub.s32 %s10, 1
    %s16 = ssub.s32 %s10, 2
    %s17 = sadd.s32 %s10, 1
    %s18 = ssub.s32 %s10, %s17
    %p19 = scmp.eq.s32.totalorder %s18, 0
    %s21 = sadd.s32 %s20, 1
    %s22 = scalar_select %p19, %s20, %s21
    %p25 = pneg %p19
    %p26 = scmp.eq.s32.totalorder %s10, 1
    %p27 = por %p25, %p26
    %p28 = scmp.ne.s32.totalorder %s20, %s23
    %p29 = scmp.eq.s32.totalorder %s10, 0
    %p30 = por %p28, %p29
    %p31 = scmp.ne.s32.totalorder %s20, %s23
    %p32 = scmp.eq.s32.totalorder %s15, 1
    %p33 = por %p31, %p32
    %p34 = scmp.ne.s32.totalorder %s23, %s24
    %p35 = scmp.eq.s32.totalorder %s15, 0
    %p36 = por %p34, %p35
    %p37 = scmp.ne.s32.totalorder %s23, %s24
    %p38 = scmp.eq.s32.totalorder %s16, 1
    %p39 = por %p37, %p38
    %p41 = scmp.ne.s32.totalorder %s24, %s40
    %p42 = scmp.eq.s32.totalorder %s16, 0
    %p43 = por %p41, %p42
    %s45 = sadd.s32 %s44, 1
    %p48 = scmp.eq.s32.totalorder %s10, 1
    %p49 = scmp.ne.s32.totalorder %s44, %s46
    %p50 = scmp.eq.s32.totalorder %s10, 0
    %p51 = por %p49, %p50
    %p52 = scmp.ne.s32.totalorder %s44, %s46
    %p53 = scmp.eq.s32.totalorder %s15, 1
    %p54 = por %p52, %p53
    %p55 = scmp.ne.s32.totalorder %s46, %s47
    %p56 = scmp.eq.s32.totalorder %s15, 0
    %p57 = por %p55, %p56
    %p58 = scmp.ne.s32.totalorder %s46, %s47
    %p59 = scmp.eq.s32.totalorder %s16, 1
    %p60 = por %p58, %p59
    %p62 = scmp.ne.s32.totalorder %s47, %s61
    %p63 = scmp.eq.s32.totalorder %s16, 0
    %p64 = por %p62, %p63
    %s66 = sadd.s32 %s65, 1
    %p69 = scmp.eq.s32.totalorder %s10, 1
    %p70 = scmp.ne.s32.totalorder %s65, %s67
    %p71 = scmp.eq.s32.totalorder %s10, 0
    %p72 = por %p70, %p71
    %p73 = scmp.ne.s32.totalorder %s65, %s67
    %p74 = scmp.eq.s32.totalorder %s15, 1
    %p75 = por %p73, %p74
    %p76 = scmp.ne.s32.totalorder %s67, %s68
    %p77 = scmp.eq.s32.totalorder %s15, 0
    %p78 = por %p76, %p77
    %p79 = scmp.ne.s32.totalorder %s67, %s68
    %p80 = scmp.eq.s32.totalorder %s16, 1
    %p81 = por %p79, %p80
    %p83 = scmp.ne.s32.totalorder %s68, %s82
    %p84 = scmp.eq.s32.totalorder %s16, 0
    %p85 = por %p83, %p84
    %s86 = ssub.s32 %s10, %s17
    %p87 = scmp.eq.s32.totalorder %s86, 0
    %s89 = sadd.s32 %s88, 1
    %s90 = scalar_select %p87, %s88, %s89
    %p93 = pneg %p87
    %p94 = scmp.eq.s32.totalorder %s10, 1
    %p95 = por %p93, %p94
    %p96 = scmp.ne.s32.totalorder %s88, %s91
    %p97 = scmp.eq.s32.totalorder %s10, 0
    %p98 = por %p96, %p97
    %p99 = scmp.ne.s32.totalorder %s88, %s91
    %p100 = scmp.eq.s32.totalorder %s15, 1
    %p101 = por %p99, %p100
    %p102 = scmp.ne.s32.totalorder %s91, %s92
    %p103 = scmp.eq.s32.totalorder %s15, 0
    %p104 = por %p102, %p103
    %p105 = scmp.ne.s32.totalorder %s91, %s92
    %p106 = scmp.eq.s32.totalorder %s16, 1
    %p107 = por %p105, %p106
    %p109 = scmp.ne.s32.totalorder %s92, %s108
    %p110 = scmp.eq.s32.totalorder %s16, 0
    %p111 = por %p109, %p110
    %s112 = ssub.s32 %s10, %s17
    %p113 = scmp.eq.s32.totalorder %s112, 0
    %s115 = sadd.s32 %s114, 1
    %s116 = scalar_select %p113, %s114, %s115
    %p119 = pneg %p113
    %p120 = scmp.eq.s32.totalorder %s10, 1
    %p121 = por %p119, %p120
    %p122 = scmp.ne.s32.totalorder %s114, %s117
    %p123 = scmp.eq.s32.totalorder %s10, 0
    %p124 = por %p122, %p123
    %p125 = scmp.ne.s32.totalorder %s114, %s117
    %p126 = scmp.eq.s32.totalorder %s15, 1
    %p127 = por %p125, %p126
    %p128 = scmp.ne.s32.totalorder %s117, %s118
    %p129 = scmp.eq.s32.totalorder %s15, 0
    %p130 = por %p128, %p129
    %p131 = scmp.ne.s32.totalorder %s117, %s118
    %p132 = scmp.eq.s32.totalorder %s16, 1
    %p133 = por %p131, %p132
    %p135 = scmp.ne.s32.totalorder %s118, %s134
    %p136 = scmp.eq.s32.totalorder %s16, 0
    %p137 = por %p135, %p136
    %p138 = scmp.le.s32.totalorder 1, %s10
    %p139 = scmp.lt.s32.totalorder %s10, 3
    %p140 = pnand %p138, %p139
    %p141 = pneg %p140
    // Predicated region
    $region9: #{up_forward.1} parent=5 // pred_check
      _
    $region10: #{up_forward.1} parent=5 // pred_check_branch
      %143 = sbr.rel (%p140) target = $region12
    $region11: #{up_forward.1} parent=5 // pred_region
      %s144 = ssub.s32 %s10, 1
      // Predicated region
      $region13: #{up_forward.1} parent=11 // pred_check
        %p145 = pneg %p57
      $region14: #{up_forward.1} parent=11 // pred_check_branch
        %147 = sbr.rel (%p145) target = $region16
      $region15: #{up_forward.1} parent=11 // pred_region
        _
      $region16: #{up_forward.1} parent=11 // pred_fallthru
        _
      // Predicated region
      $region17: #{up_forward.1} parent=11 // pred_check
        %p148 = pneg %p78
      $region18: #{up_forward.1} parent=11 // pred_check_branch
        %150 = sbr.rel (%p148) target = $region20
      $region19: #{up_forward.1} parent=11 // pred_region
        _
      $region20: #{up_forward.1} parent=11 // pred_fallthru
        _
    $region12: #{up_forward.1} parent=5 // pred_fallthru
      _
    %p151 = scmp.lt.s32.totalorder %s10, 2
    // Predicated region
    $region21: #{up_forward.1} parent=5 // pred_check
      %p152 = pneg %p151
    $region22: #{up_forward.1} parent=5 // pred_check_branch
      %154 = sbr.rel (%p152) target = $region24
    $region23: #{up_forward.1} parent=5 // pred_region
      // Predicated region
      $region25: #{up_forward.1} parent=23 // pred_check
        %p155 = pneg %p30
      $region26: #{up_forward.1} parent=23 // pred_check_branch
        %157 = sbr.rel (%p155) target = $region28
      $region27: #{up_forward.1} parent=23 // pred_region
        %s158 = smul.u32 8, %s10
        %p159 = scmp.lt.s32.totalorder %s158, 15
        %s160 = scalar_select %p159, %s158, 15
        %s161 = smul.addr %s160, 2
        %s162 = smul.addr %s161, 8
        %s163 = scalar_lea.vmem %s0, %s162
        %s164 = smul.u32 8, %s10
      $region28: #{up_forward.1} parent=23 // pred_fallthru
        _
      // Predicated region
      $region29: #{up_forward.1} parent=23 // pred_check
        %p165 = pneg %p98
      $region30: #{up_forward.1} parent=23 // pred_check_branch
        %167 = sbr.rel (%p165) target = $region32
      $region31: #{up_forward.1} parent=23 // pred_region
        %s168 = smul.u32 8, %s10
        %p169 = scmp.lt.s32.totalorder %s168, 15
        %s170 = scalar_select %p169, %s168, 15
        %s171 = smul.addr %s170, 4
        %s172 = smul.addr %s171, 8
        %s173 = scalar_lea.vmem %s3, %s172
        %s174 = smul.u32 8, %s10
      $region32: #{up_forward.1} parent=23 // pred_fallthru
        _
    $region24: #{up_forward.1} parent=5 // pred_fallthru
      _
    %p175 = scmp.le.s32.totalorder 1, %s10
    %p176 = scmp.lt.s32.totalorder %s10, 3
    %p177 = pnand %p175, %p176
    %p178 = pneg %p177
    // Predicated region
    $region33: #{up_forward.1} parent=5 // pred_check
      _
    $region34: #{up_forward.1} parent=5 // pred_check_branch
      %180 = sbr.rel (%p177) target = $region36
    $region35: #{up_forward.1} parent=5 // pred_region
      %s181 = ssub.s32 %s10, 1
      %s182 = smul.u32 8, %s15
      %p183 = scmp.lt.s32.totalorder %s182, 15
      %s184 = scalar_select %p183, %s182, 15
      %s185 = smul.addr %s184, 2
      %s186 = smul.addr %s185, 8
      %s187 = scalar_lea.vmem %s0, %s186
      %p188 = pneg %p36
      %p189 = pneg %p33
      %p190 = pneg %p57
      %p191 = pneg %p54
      %p192 = pneg %p78
      %p193 = pneg %p75
      %s194 = smul.u32 8, %s15
      %p195 = scmp.lt.s32.totalorder %s194, 15
      %s196 = scalar_select %p195, %s194, 15
      %s197 = smul.addr %s196, 4
      %s198 = smul.addr %s197, 8
      %s199 = scalar_lea.vmem %s3, %s198
      %p200 = pneg %p104
      %p201 = pneg %p101
      %p202 = pneg %p130
      %p203 = pneg %p127
      %s204 = smul.u32 8, %s15
      %p205 = scmp.lt.s32.totalorder %s204, 15
      %s206 = scalar_select %p205, %s204, 15
      %s207 = smul.addr %s206, 4
      %s208 = smul.addr %s207, 8
      %s209 = scalar_lea.vmem %s4, %s208
      %s210 = smul.u32 8, %s15
      %p211 = scmp.lt.s32.totalorder %s210, 15
      %s212 = scalar_select %p211, %s210, 15
      %s213 = smul.addr %s212, 2
      %s214 = smul.addr %s213, 8
      %s215 = scalar_lea.vmem %s0, %s214
      %s216 = smul.u32 8, %s15
      %s217 = smul.u32 8, %s15
      %p218 = scmp.lt.s32.totalorder %s217, 15
      %s219 = scalar_select %p218, %s217, 15
      %s220 = smul.addr %s219, 4
      %s221 = smul.addr %s220, 8
      %s222 = scalar_lea.vmem %s3, %s221
      %s223 = smul.u32 8, %s15
      %s224 = smul.u32 8, %s15
      %p225 = scmp.lt.s32.totalorder %s224, 15
      %s226 = scalar_select %p225, %s224, 15
      %s227 = smul.addr %s226, 4
      %s228 = smul.addr %s227, 8
      %s229 = scalar_lea.vmem %s4, %s228
      %s230 = smul.u32 8, %s15
      %v231 = vld [vmem:[%s215] sm:$0xff]
      %v232 = vld [vmem:[%s215 + $0x8] sm:$0xff]
      %v233 = vld [vmem:[%s215 + $0x10] sm:$0xff]
      %v234 = vld [vmem:[%s215 + $0x18] sm:$0xff]
      %v235 = vld [vmem:[%s215 + $0x20] sm:$0xff]
      %v236 = vld [vmem:[%s215 + $0x28] sm:$0xff]
      %v237 = vld [vmem:[%s215 + $0x30] sm:$0xff]
      %v238 = vld [vmem:[%s215 + $0x38] sm:$0xff]
      %v239 = vld [vmem:[%s215 + $0x40] sm:$0xff]
      %v240 = vld [vmem:[%s215 + $0x48] sm:$0xff]
      %v241 = vld [vmem:[%s215 + $0x50] sm:$0xff]
      %v242 = vld [vmem:[%s215 + $0x58] sm:$0xff]
      %v243 = vld [vmem:[%s215 + $0x60] sm:$0xff]
      %v244 = vld [vmem:[%s215 + $0x68] sm:$0xff]
      %v245 = vld [vmem:[%s215 + $0x70] sm:$0xff]
      %v246 = vld [vmem:[%s215 + $0x78] sm:$0xff]
      %v247 = vpack.c.bf16 %v233, %v231
      %v248 = vpack.c.bf16 %v234, %v232
      %v249 = vpack.c.bf16 %v237, %v235
      %v250 = vpack.c.bf16 %v238, %v236
      %v251 = vpack.c.bf16 %v241, %v239
      %v252 = vpack.c.bf16 %v242, %v240
      %v253 = vpack.c.bf16 %v245, %v243
      %v254 = vpack.c.bf16 %v246, %v244
      %v255 = vld [vmem:[%s2] sm:$0x3]
      %v256 = vld [vmem:[%s1] sm:$0xff]
      %v257 = vld [vmem:[%s1 + $0x8] sm:$0xff]
      %v258 = vld [vmem:[%s1 + $0x10] sm:$0xff]
      %v259 = vld [vmem:[%s1 + $0x18] sm:$0xff]
      %v260 = vld [vmem:[%s1 + $0x20] sm:$0xff]
      %v261 = vld [vmem:[%s1 + $0x28] sm:$0xff]
      %v262 = vld [vmem:[%s1 + $0x30] sm:$0xff]
      %v263 = vld [vmem:[%s1 + $0x38] sm:$0xff]
      %v264 = vld [vmem:[%s1 + $0x40] sm:$0xff]
      %v265 = vld [vmem:[%s1 + $0x48] sm:$0xff]
      %v266 = vld [vmem:[%s1 + $0x50] sm:$0xff]
      %v267 = vld [vmem:[%s1 + $0x58] sm:$0xff]
      %v268 = vld [vmem:[%s1 + $0x60] sm:$0xff]
      %v269 = vld [vmem:[%s1 + $0x68] sm:$0xff]
      %v270 = vld [vmem:[%s1 + $0x70] sm:$0xff]
      %v271 = vld [vmem:[%s1 + $0x78] sm:$0xff]
      %v272 = vld [vmem:[%s1 + $0x80] sm:$0xff]
      %v273 = vld [vmem:[%s1 + $0x88] sm:$0xff]
      %v274 = vld [vmem:[%s1 + $0x90] sm:$0xff]
      %v275 = vld [vmem:[%s1 + $0x98] sm:$0xff]
      %v276 = vld [vmem:[%s1 + $0xa0] sm:$0xff]
      %v277 = vld [vmem:[%s1 + $0xa8] sm:$0xff]
      %v278 = vld [vmem:[%s1 + $0xb0] sm:$0xff]
      %v279 = vld [vmem:[%s1 + $0xb8] sm:$0xff]
      %v280 = vld [vmem:[%s1 + $0xc0] sm:$0xff]
      %v281 = vld [vmem:[%s1 + $0xc8] sm:$0xff]
      %v282 = vld [vmem:[%s1 + $0xd0] sm:$0xff]
      %v283 = vld [vmem:[%s1 + $0xd8] sm:$0xff]
      %v284 = vld [vmem:[%s1 + $0xe0] sm:$0xff]
      %v285 = vld [vmem:[%s1 + $0xe8] sm:$0xff]
      %v286 = vld [vmem:[%s1 + $0xf0] sm:$0xff]
      %v287 = vld [vmem:[%s1 + $0xf8] sm:$0xff]
      %v320 = vunpack.c.l.b16 %v256
      %v321 = vunpack.c.h.b16 %v256
      %v322 = vunpack.c.l.b16 %v257
      %v323 = vunpack.c.h.b16 %v257
      %v324 = vunpack.c.l.b16 %v258
      %v325 = vunpack.c.h.b16 %v258
      %v326 = vunpack.c.l.b16 %v259
      %v327 = vunpack.c.h.b16 %v259
      %v328 = vunpack.c.l.b16 %v260
      %v329 = vunpack.c.h.b16 %v260
      %v330 = vunpack.c.l.b16 %v261
      %v331 = vunpack.c.h.b16 %v261
      %v332 = vunpack.c.l.b16 %v262
      %v333 = vunpack.c.h.b16 %v262
      %v334 = vunpack.c.l.b16 %v263
      %v335 = vunpack.c.h.b16 %v263
      %v336 = vunpack.c.l.b16 %v264
      %v337 = vunpack.c.h.b16 %v264
      %v338 = vunpack.c.l.b16 %v265
      %v339 = vunpack.c.h.b16 %v265
      %v340 = vunpack.c.l.b16 %v266
      %v341 = vunpack.c.h.b16 %v266
      %v342 = vunpack.c.l.b16 %v267
      %v343 = vunpack.c.h.b16 %v267
      %v344 = vunpack.c.l.b16 %v268
      %v345 = vunpack.c.h.b16 %v268
      %v346 = vunpack.c.l.b16 %v269
      %v347 = vunpack.c.h.b16 %v269
      %v348 = vunpack.c.l.b16 %v270
      %v349 = vunpack.c.h.b16 %v270
      %v350 = vunpack.c.l.b16 %v271
      %v351 = vunpack.c.h.b16 %v271
      %v352 = vunpack.c.l.b16 %v272
      %v353 = vunpack.c.h.b16 %v272
      %v354 = vunpack.c.l.b16 %v273
      %v355 = vunpack.c.h.b16 %v273
      %v356 = vunpack.c.l.b16 %v274
      %v357 = vunpack.c.h.b16 %v274
      %v358 = vunpack.c.l.b16 %v275
      %v359 = vunpack.c.h.b16 %v275
      %v360 = vunpack.c.l.b16 %v276
      %v361 = vunpack.c.h.b16 %v276
      %v362 = vunpack.c.l.b16 %v277
      %v363 = vunpack.c.h.b16 %v277
      %v364 = vunpack.c.l.b16 %v278
      %v365 = vunpack.c.h.b16 %v278
      %v366 = vunpack.c.l.b16 %v279
      %v367 = vunpack.c.h.b16 %v279
      %v368 = vunpack.c.l.b16 %v280
      %v369 = vunpack.c.h.b16 %v280
      %v370 = vunpack.c.l.b16 %v281
      %v371 = vunpack.c.h.b16 %v281
      %v372 = vunpack.c.l.b16 %v282
      %v373 = vunpack.c.h.b16 %v282
      %v374 = vunpack.c.l.b16 %v283
      %v375 = vunpack.c.h.b16 %v283
      %v376 = vunpack.c.l.b16 %v284
      %v377 = vunpack.c.h.b16 %v284
      %v378 = vunpack.c.l.b16 %v285
      %v379 = vunpack.c.h.b16 %v285
      %v380 = vunpack.c.l.b16 %v286
      %v381 = vunpack.c.h.b16 %v286
      %v382 = vunpack.c.l.b16 %v287
      %v383 = vunpack.c.h.b16 %v287
      %v384 = vpack.c.b16 %v322, %v320
      %v385 = vpack.c.b16 %v323, %v321
      %v386 = vpack.c.b16 %v326, %v324
      %v387 = vpack.c.b16 %v327, %v325
      %v388 = vpack.c.b16 %v330, %v328
      %v389 = vpack.c.b16 %v331, %v329
      %v390 = vpack.c.b16 %v334, %v332
      %v391 = vpack.c.b16 %v335, %v333
      %v392 = vpack.c.b16 %v338, %v336
      %v393 = vpack.c.b16 %v339, %v337
      %v394 = vpack.c.b16 %v342, %v340
      %v395 = vpack.c.b16 %v343, %v341
      %v396 = vpack.c.b16 %v346, %v344
      %v397 = vpack.c.b16 %v347, %v345
      %v398 = vpack.c.b16 %v350, %v348
      %v399 = vpack.c.b16 %v351, %v349
      %v400 = vpack.c.b16 %v354, %v352
      %v401 = vpack.c.b16 %v355, %v353
      %v402 = vpack.c.b16 %v358, %v356
      %v403 = vpack.c.b16 %v359, %v357
      %v404 = vpack.c.b16 %v362, %v360
      %v405 = vpack.c.b16 %v363, %v361
      %v406 = vpack.c.b16 %v366, %v364
      %v407 = vpack.c.b16 %v367, %v365
      %v408 = vpack.c.b16 %v370, %v368
      %v409 = vpack.c.b16 %v371, %v369
      %v410 = vpack.c.b16 %v374, %v372
      %v411 = vpack.c.b16 %v375, %v373
      %v412 = vpack.c.b16 %v378, %v376
      %v413 = vpack.c.b16 %v379, %v377
      %v414 = vpack.c.b16 %v382, %v380
      %v415 = vpack.c.b16 %v383, %v381
      %448 = vmatpush.bf16.msra.mxu0 %v398
      %449 = vmatpush.bf16.msra.mxu0 %v396
      %450 = vmatpush.bf16.msra.mxu0 %v394
      %451 = vmatpush.bf16.msra.mxu0 %v392
      %452 = vmatpush.bf16.msra.mxu0 %v390
      %453 = vmatpush.bf16.msra.mxu0 %v388
      %454 = vmatpush.bf16.msra.mxu0 %v386
      %455 = vmatpush.bf16.msra.mxu0 %v384
      %456 = vmatmul.bf16.gmra.mxu0 %v247
      %v457 = vpop.f32.mrf.mxu0
      %v458 = vadd.f32 0.0, %v457
      %v459 = vpop.f32.mrf.mxu0
      %v460 = vadd.f32 0.0, %v459
      %461 = vmatmul.bf16.gmra.mxu0 %v249
      %v462 = vpop.f32.mrf.mxu0
      %v463 = vadd.f32 0.0, %v462
      %v464 = vpop.f32.mrf.mxu0
      %v465 = vadd.f32 0.0, %v464
      %466 = vmatmul.bf16.gmra.mxu0 %v251
      %v467 = vpop.f32.mrf.mxu0
      %v468 = vadd.f32 0.0, %v467
      %v469 = vpop.f32.mrf.mxu0
      %v470 = vadd.f32 0.0, %v469
      %471 = vmatmul.bf16.gmra.mxu0 %v253
      %v472 = vpop.f32.mrf.mxu0
      %v473 = vadd.f32 0.0, %v472
      %v474 = vpop.f32.mrf.mxu0
      %v475 = vadd.f32 0.0, %v474
      %476 = vdwg.mxu0
      %477 = vmatpush.bf16.msra.mxu0 %v414
      %478 = vmatpush.bf16.msra.mxu0 %v412
      %479 = vmatpush.bf16.msra.mxu0 %v410
      %480 = vmatpush.bf16.msra.mxu0 %v408
      %481 = vmatpush.bf16.msra.mxu0 %v406
      %482 = vmatpush.bf16.msra.mxu0 %v404
      %483 = vmatpush.bf16.msra.mxu0 %v402
      %484 = vmatpush.bf16.msra.mxu0 %v400
      %485 = vmatmul.bf16.gmra.mxu0 %v248
      %v486 = vpop.f32.mrf.mxu0
      %v487 = vadd.f32 %v458, %v486
      %v488 = vpop.f32.mrf.mxu0
      %v489 = vadd.f32 %v460, %v488
      %490 = vmatmul.bf16.gmra.mxu0 %v250
      %v491 = vpop.f32.mrf.mxu0
      %v492 = vadd.f32 %v463, %v491
      %v493 = vpop.f32.mrf.mxu0
      %v494 = vadd.f32 %v465, %v493
      %495 = vmatmul.bf16.gmra.mxu0 %v252
      %v496 = vpop.f32.mrf.mxu0
      %v497 = vadd.f32 %v468, %v496
      %v498 = vpop.f32.mrf.mxu0
      %v499 = vadd.f32 %v470, %v498
      %500 = vmatmul.bf16.gmra.mxu0 %v254
      %v501 = vpop.f32.mrf.mxu0
      %v502 = vadd.f32 %v473, %v501
      %v503 = vpop.f32.mrf.mxu0
      %v504 = vadd.f32 %v475, %v503
      %505 = vdwg.mxu0
      %506 = vmatpush.bf16.msra.mxu0 %v399
      %507 = vmatpush.bf16.msra.mxu0 %v397
      %508 = vmatpush.bf16.msra.mxu0 %v395
      %509 = vmatpush.bf16.msra.mxu0 %v393
      %510 = vmatpush.bf16.msra.mxu0 %v391
      %511 = vmatpush.bf16.msra.mxu0 %v389
      %512 = vmatpush.bf16.msra.mxu0 %v387
      %513 = vmatpush.bf16.msra.mxu0 %v385
      %514 = vmatmul.bf16.gmra.mxu0 %v247
      %v515 = vpop.f32.mrf.mxu0
      %v516 = vadd.f32 0.0, %v515
      %v517 = vpop.f32.mrf.mxu0
      %v518 = vadd.f32 0.0, %v517
      %519 = vmatmul.bf16.gmra.mxu0 %v249
      %v520 = vpop.f32.mrf.mxu0
      %v521 = vadd.f32 0.0, %v520
      %v522 = vpop.f32.mrf.mxu0
      %v523 = vadd.f32 0.0, %v522
      %524 = vmatmul.bf16.gmra.mxu0 %v251
      %v525 = vpop.f32.mrf.mxu0
      %v526 = vadd.f32 0.0, %v525
      %v527 = vpop.f32.mrf.mxu0
      %v528 = vadd.f32 0.0, %v527
      %529 = vmatmul.bf16.gmra.mxu0 %v253
      %v530 = vpop.f32.mrf.mxu0
      %v531 = vadd.f32 0.0, %v530
      %v532 = vpop.f32.mrf.mxu0
      %v533 = vadd.f32 0.0, %v532
      %534 = vdwg.mxu0
      %535 = vmatpush.bf16.msra.mxu0 %v415
      %536 = vmatpush.bf16.msra.mxu0 %v413
      %537 = vmatpush.bf16.msra.mxu0 %v411
      %538 = vmatpush.bf16.msra.mxu0 %v409
      %539 = vmatpush.bf16.msra.mxu0 %v407
      %540 = vmatpush.bf16.msra.mxu0 %v405
      %541 = vmatpush.bf16.msra.mxu0 %v403
      %542 = vmatpush.bf16.msra.mxu0 %v401
      %543 = vmatmul.bf16.gmra.mxu0 %v248
      %v544 = vpop.f32.mrf.mxu0
      %v545 = vadd.f32 %v516, %v544
      %v546 = vpop.f32.mrf.mxu0
      %v547 = vadd.f32 %v518, %v546
      %548 = vmatmul.bf16.gmra.mxu0 %v250
      %v549 = vpop.f32.mrf.mxu0
      %v550 = vadd.f32 %v521, %v549
      %v551 = vpop.f32.mrf.mxu0
      %v552 = vadd.f32 %v523, %v551
      %553 = vmatmul.bf16.gmra.mxu0 %v252
      %v554 = vpop.f32.mrf.mxu0
      %v555 = vadd.f32 %v526, %v554
      %v556 = vpop.f32.mrf.mxu0
      %v557 = vadd.f32 %v528, %v556
      %558 = vmatmul.bf16.gmra.mxu0 %v254
      %v559 = vpop.f32.mrf.mxu0
      %v560 = vadd.f32 %v531, %v559
      %v561 = vpop.f32.mrf.mxu0
      %v562 = vadd.f32 %v533, %v561
      %563 = vdwg.mxu0
      %v565 = vperm.slane %v255, 0
      %v566 = vperm.slane %v255, 1
      %v569 = vadd.f32 %v487, %v565
      %v570 = vadd.f32 %v545, %v566
      %v571 = vadd.f32 %v489, %v565
      %v572 = vadd.f32 %v547, %v566
      %v573 = vadd.f32 %v492, %v565
      %v574 = vadd.f32 %v550, %v566
      %v575 = vadd.f32 %v494, %v565
      %v576 = vadd.f32 %v552, %v566
      %v577 = vadd.f32 %v497, %v565
      %v578 = vadd.f32 %v555, %v566
      %v579 = vadd.f32 %v499, %v565
      %v580 = vadd.f32 %v557, %v566
      %v581 = vadd.f32 %v502, %v565
      %v582 = vadd.f32 %v560, %v566
      %v583 = vadd.f32 %v504, %v565
      %v584 = vadd.f32 %v562, %v566
      %v585 = vld [vmem:[%s222] sm:$0xff]
      %v586 = vld [vmem:[%s222 + $0x8] sm:$0xff]
      %v587 = vld [vmem:[%s222 + $0x20] sm:$0xff]
      %v588 = vld [vmem:[%s222 + $0x28] sm:$0xff]
      %v589 = vld [vmem:[%s222 + $0x40] sm:$0xff]
      %v590 = vld [vmem:[%s222 + $0x48] sm:$0xff]
      %v591 = vld [vmem:[%s222 + $0x60] sm:$0xff]
      %v592 = vld [vmem:[%s222 + $0x68] sm:$0xff]
      %v593 = vld [vmem:[%s222 + $0x80] sm:$0xff]
      %v594 = vld [vmem:[%s222 + $0x88] sm:$0xff]
      %v595 = vld [vmem:[%s222 + $0xa0] sm:$0xff]
      %v596 = vld [vmem:[%s222 + $0xa8] sm:$0xff]
      %v597 = vld [vmem:[%s222 + $0xc0] sm:$0xff]
      %v598 = vld [vmem:[%s222 + $0xc8] sm:$0xff]
      %v599 = vld [vmem:[%s222 + $0xe0] sm:$0xff]
      %v600 = vld [vmem:[%s222 + $0xe8] sm:$0xff]
      %v601 = vadd.f32 %v569, %v585
      %v602 = vadd.f32 %v570, %v586
      %v603 = vadd.f32 %v571, %v587
      %v604 = vadd.f32 %v572, %v588
      %v605 = vadd.f32 %v573, %v589
      %v606 = vadd.f32 %v574, %v590
      %v607 = vadd.f32 %v575, %v591
      %v608 = vadd.f32 %v576, %v592
      %v609 = vadd.f32 %v577, %v593
      %v610 = vadd.f32 %v578, %v594
      %v611 = vadd.f32 %v579, %v595
      %v612 = vadd.f32 %v580, %v596
      %v613 = vadd.f32 %v581, %v597
      %v614 = vadd.f32 %v582, %v598
      %v615 = vadd.f32 %v583, %v599
      %v616 = vadd.f32 %v584, %v600
      %617 = vst [vmem:[%s229] sm:$0xff] %v601
      %618 = vst [vmem:[%s229 + $0x8] sm:$0xff] %v602
      %619 = vst [vmem:[%s229 + $0x20] sm:$0xff] %v603
      %620 = vst [vmem:[%s229 + $0x28] sm:$0xff] %v604
      %621 = vst [vmem:[%s229 + $0x40] sm:$0xff] %v605
      %622 = vst [vmem:[%s229 + $0x48] sm:$0xff] %v606
      %623 = vst [vmem:[%s229 + $0x60] sm:$0xff] %v607
      %624 = vst [vmem:[%s229 + $0x68] sm:$0xff] %v608
      %625 = vst [vmem:[%s229 + $0x80] sm:$0xff] %v609
      %626 = vst [vmem:[%s229 + $0x88] sm:$0xff] %v610
      %627 = vst [vmem:[%s229 + $0xa0] sm:$0xff] %v611
      %628 = vst [vmem:[%s229 + $0xa8] sm:$0xff] %v612
      %629 = vst [vmem:[%s229 + $0xc0] sm:$0xff] %v613
      %630 = vst [vmem:[%s229 + $0xc8] sm:$0xff] %v614
      %631 = vst [vmem:[%s229 + $0xe0] sm:$0xff] %v615
      %632 = vst [vmem:[%s229 + $0xe8] sm:$0xff] %v616
      %s633 = scalar_lea.vmem %s1, 256
      %v634 = vld [vmem:[%s633] sm:$0xff]
      %v635 = vld [vmem:[%s633 + $0x8] sm:$0xff]
      %v636 = vld [vmem:[%s633 + $0x10] sm:$0xff]
      %v637 = vld [vmem:[%s633 + $0x18] sm:$0xff]
      %v638 = vld [vmem:[%s633 + $0x20] sm:$0xff]
      %v639 = vld [vmem:[%s633 + $0x28] sm:$0xff]
      %v640 = vld [vmem:[%s633 + $0x30] sm:$0xff]
      %v641 = vld [vmem:[%s633 + $0x38] sm:$0xff]
      %v642 = vld [vmem:[%s633 + $0x40] sm:$0xff]
      %v643 = vld [vmem:[%s633 + $0x48] sm:$0xff]
      %v644 = vld [vmem:[%s633 + $0x50] sm:$0xff]
      %v645 = vld [vmem:[%s633 + $0x58] sm:$0xff]
      %v646 = vld [vmem:[%s633 + $0x60] sm:$0xff]
      %v647 = vld [vmem:[%s633 + $0x68] sm:$0xff]
      %v648 = vld [vmem:[%s633 + $0x70] sm:$0xff]
      %v649 = vld [vmem:[%s633 + $0x78] sm:$0xff]
      %v650 = vld [vmem:[%s633 + $0x80] sm:$0xff]
      %v651 = vld [vmem:[%s633 + $0x88] sm:$0xff]
      %v652 = vld [vmem:[%s633 + $0x90] sm:$0xff]
      %v653 = vld [vmem:[%s633 + $0x98] sm:$0xff]
      %v654 = vld [vmem:[%s633 + $0xa0] sm:$0xff]
      %v655 = vld [vmem:[%s633 + $0xa8] sm:$0xff]
      %v656 = vld [vmem:[%s633 + $0xb0] sm:$0xff]
      %v657 = vld [vmem:[%s633 + $0xb8] sm:$0xff]
      %v658 = vld [vmem:[%s633 + $0xc0] sm:$0xff]
      %v659 = vld [vmem:[%s633 + $0xc8] sm:$0xff]
      %v660 = vld [vmem:[%s633 + $0xd0] sm:$0xff]
      %v661 = vld [vmem:[%s633 + $0xd8] sm:$0xff]
      %v662 = vld [vmem:[%s633 + $0xe0] sm:$0xff]
      %v663 = vld [vmem:[%s633 + $0xe8] sm:$0xff]
      %v664 = vld [vmem:[%s633 + $0xf0] sm:$0xff]
      %v665 = vld [vmem:[%s633 + $0xf8] sm:$0xff]
      %v698 = vunpack.c.l.b16 %v634
      %v699 = vunpack.c.h.b16 %v634
      %v700 = vunpack.c.l.b16 %v635
      %v701 = vunpack.c.h.b16 %v635
      %v702 = vunpack.c.l.b16 %v636
      %v703 = vunpack.c.h.b16 %v636
      %v704 = vunpack.c.l.b16 %v637
      %v705 = vunpack.c.h.b16 %v637
      %v706 = vunpack.c.l.b16 %v638
      %v707 = vunpack.c.h.b16 %v638
      %v708 = vunpack.c.l.b16 %v639
      %v709 = vunpack.c.h.b16 %v639
      %v710 = vunpack.c.l.b16 %v640
      %v711 = vunpack.c.h.b16 %v640
      %v712 = vunpack.c.l.b16 %v641
      %v713 = vunpack.c.h.b16 %v641
      %v714 = vunpack.c.l.b16 %v642
      %v715 = vunpack.c.h.b16 %v642
      %v716 = vunpack.c.l.b16 %v643
      %v717 = vunpack.c.h.b16 %v643
      %v718 = vunpack.c.l.b16 %v644
      %v719 = vunpack.c.h.b16 %v644
      %v720 = vunpack.c.l.b16 %v645
      %v721 = vunpack.c.h.b16 %v645
      %v722 = vunpack.c.l.b16 %v646
      %v723 = vunpack.c.h.b16 %v646
      %v724 = vunpack.c.l.b16 %v647
      %v725 = vunpack.c.h.b16 %v647
      %v726 = vunpack.c.l.b16 %v648
      %v727 = vunpack.c.h.b16 %v648
      %v728 = vunpack.c.l.b16 %v649
      %v729 = vunpack.c.h.b16 %v649
      %v730 = vunpack.c.l.b16 %v650
      %v731 = vunpack.c.h.b16 %v650
      %v732 = vunpack.c.l.b16 %v651
      %v733 = vunpack.c.h.b16 %v651
      %v734 = vunpack.c.l.b16 %v652
      %v735 = vunpack.c.h.b16 %v652
      %v736 = vunpack.c.l.b16 %v653
      %v737 = vunpack.c.h.b16 %v653
      %v738 = vunpack.c.l.b16 %v654
      %v739 = vunpack.c.h.b16 %v654
      %v740 = vunpack.c.l.b16 %v655
      %v741 = vunpack.c.h.b16 %v655
      %v742 = vunpack.c.l.b16 %v656
      %v743 = vunpack.c.h.b16 %v656
      %v744 = vunpack.c.l.b16 %v657
      %v745 = vunpack.c.h.b16 %v657
      %v746 = vunpack.c.l.b16 %v658
      %v747 = vunpack.c.h.b16 %v658
      %v748 = vunpack.c.l.b16 %v659
      %v749 = vunpack.c.h.b16 %v659
      %v750 = vunpack.c.l.b16 %v660
      %v751 = vunpack.c.h.b16 %v660
      %v752 = vunpack.c.l.b16 %v661
      %v753 = vunpack.c.h.b16 %v661
      %v754 = vunpack.c.l.b16 %v662
      %v755 = vunpack.c.h.b16 %v662
      %v756 = vunpack.c.l.b16 %v663
      %v757 = vunpack.c.h.b16 %v663
      %v758 = vunpack.c.l.b16 %v664
      %v759 = vunpack.c.h.b16 %v664
      %v760 = vunpack.c.l.b16 %v665
      %v761 = vunpack.c.h.b16 %v665
      %v762 = vpack.c.b16 %v700, %v698
      %v763 = vpack.c.b16 %v701, %v699
      %v764 = vpack.c.b16 %v704, %v702
      %v765 = vpack.c.b16 %v705, %v703
      %v766 = vpack.c.b16 %v708, %v706
      %v767 = vpack.c.b16 %v709, %v707
      %v768 = vpack.c.b16 %v712, %v710
      %v769 = vpack.c.b16 %v713, %v711
      %v770 = vpack.c.b16 %v716, %v714
      %v771 = vpack.c.b16 %v717, %v715
      %v772 = vpack.c.b16 %v720, %v718
      %v773 = vpack.c.b16 %v721, %v719
      %v774 = vpack.c.b16 %v724, %v722
      %v775 = vpack.c.b16 %v725, %v723
      %v776 = vpack.c.b16 %v728, %v726
      %v777 = vpack.c.b16 %v729, %v727
      %v778 = vpack.c.b16 %v732, %v730
      %v779 = vpack.c.b16 %v733, %v731
      %v780 = vpack.c.b16 %v736, %v734
      %v781 = vpack.c.b16 %v737, %v735
      %v782 = vpack.c.b16 %v740, %v738
      %v783 = vpack.c.b16 %v741, %v739
      %v784 = vpack.c.b16 %v744, %v742
      %v785 = vpack.c.b16 %v745, %v743
      %v786 = vpack.c.b16 %v748, %v746
      %v787 = vpack.c.b16 %v749, %v747
      %v788 = vpack.c.b16 %v752, %v750
      %v789 = vpack.c.b16 %v753, %v751
      %v790 = vpack.c.b16 %v756, %v754
      %v791 = vpack.c.b16 %v757, %v755
      %v792 = vpack.c.b16 %v760, %v758
      %v793 = vpack.c.b16 %v761, %v759
      %826 = vmatpush.bf16.msra.mxu0 %v776
      %827 = vmatpush.bf16.msra.mxu0 %v774
      %828 = vmatpush.bf16.msra.mxu0 %v772
      %829 = vmatpush.bf16.msra.mxu0 %v770
      %830 = vmatpush.bf16.msra.mxu0 %v768
      %831 = vmatpush.bf16.msra.mxu0 %v766
      %832 = vmatpush.bf16.msra.mxu0 %v764
      %833 = vmatpush.bf16.msra.mxu0 %v762
      %834 = vmatmul.bf16.gmra.mxu0 %v247
      %v835 = vpop.f32.mrf.mxu0
      %v836 = vadd.f32 0.0, %v835
      %v837 = vpop.f32.mrf.mxu0
      %v838 = vadd.f32 0.0, %v837
      %839 = vmatmul.bf16.gmra.mxu0 %v249
      %v840 = vpop.f32.mrf.mxu0
      %v841 = vadd.f32 0.0, %v840
      %v842 = vpop.f32.mrf.mxu0
      %v843 = vadd.f32 0.0, %v842
      %844 = vmatmul.bf16.gmra.mxu0 %v251
      %v845 = vpop.f32.mrf.mxu0
      %v846 = vadd.f32 0.0, %v845
      %v847 = vpop.f32.mrf.mxu0
      %v848 = vadd.f32 0.0, %v847
      %849 = vmatmul.bf16.gmra.mxu0 %v253
      %v850 = vpop.f32.mrf.mxu0
      %v851 = vadd.f32 0.0, %v850
      %v852 = vpop.f32.mrf.mxu0
      %v853 = vadd.f32 0.0, %v852
      %854 = vdwg.mxu0
      %855 = vmatpush.bf16.msra.mxu0 %v792
      %856 = vmatpush.bf16.msra.mxu0 %v790
      %857 = vmatpush.bf16.msra.mxu0 %v788
      %858 = vmatpush.bf16.msra.mxu0 %v786
      %859 = vmatpush.bf16.msra.mxu0 %v784
      %860 = vmatpush.bf16.msra.mxu0 %v782
      %861 = vmatpush.bf16.msra.mxu0 %v780
      %862 = vmatpush.bf16.msra.mxu0 %v778
      %863 = vmatmul.bf16.gmra.mxu0 %v248
      %v864 = vpop.f32.mrf.mxu0
      %v865 = vadd.f32 %v836, %v864
      %v866 = vpop.f32.mrf.mxu0
      %v867 = vadd.f32 %v838, %v866
      %868 = vmatmul.bf16.gmra.mxu0 %v250
      %v869 = vpop.f32.mrf.mxu0
      %v870 = vadd.f32 %v841, %v869
      %v871 = vpop.f32.mrf.mxu0
      %v872 = vadd.f32 %v843, %v871
      %873 = vmatmul.bf16.gmra.mxu0 %v252
      %v874 = vpop.f32.mrf.mxu0
      %v875 = vadd.f32 %v846, %v874
      %v876 = vpop.f32.mrf.mxu0
      %v877 = vadd.f32 %v848, %v876
      %878 = vmatmul.bf16.gmra.mxu0 %v254
      %v879 = vpop.f32.mrf.mxu0
      %v880 = vadd.f32 %v851, %v879
      %v881 = vpop.f32.mrf.mxu0
      %v882 = vadd.f32 %v853, %v881
      %883 = vdwg.mxu0
      %884 = vmatpush.bf16.msra.mxu0 %v777
      %885 = vmatpush.bf16.msra.mxu0 %v775
      %886 = vmatpush.bf16.msra.mxu0 %v773
      %887 = vmatpush.bf16.msra.mxu0 %v771
      %888 = vmatpush.bf16.msra.mxu0 %v769
      %889 = vmatpush.bf16.msra.mxu0 %v767
      %890 = vmatpush.bf16.msra.mxu0 %v765
      %891 = vmatpush.bf16.msra.mxu0 %v763
      %892 = vmatmul.bf16.gmra.mxu0 %v247
      %v893 = vpop.f32.mrf.mxu0
      %v894 = vadd.f32 0.0, %v893
      %v895 = vpop.f32.mrf.mxu0
      %v896 = vadd.f32 0.0, %v895
      %897 = vmatmul.bf16.gmra.mxu0 %v249
      %v898 = vpop.f32.mrf.mxu0
      %v899 = vadd.f32 0.0, %v898
      %v900 = vpop.f32.mrf.mxu0
      %v901 = vadd.f32 0.0, %v900
      %902 = vmatmul.bf16.gmra.mxu0 %v251
      %v903 = vpop.f32.mrf.mxu0
      %v904 = vadd.f32 0.0, %v903
      %v905 = vpop.f32.mrf.mxu0
      %v906 = vadd.f32 0.0, %v905
      %907 = vmatmul.bf16.gmra.mxu0 %v253
      %v908 = vpop.f32.mrf.mxu0
      %v909 = vadd.f32 0.0, %v908
      %v910 = vpop.f32.mrf.mxu0
      %v911 = vadd.f32 0.0, %v910
      %912 = vdwg.mxu0
      %913 = vmatpush.bf16.msra.mxu0 %v793
      %914 = vmatpush.bf16.msra.mxu0 %v791
      %915 = vmatpush.bf16.msra.mxu0 %v789
      %916 = vmatpush.bf16.msra.mxu0 %v787
      %917 = vmatpush.bf16.msra.mxu0 %v785
      %918 = vmatpush.bf16.msra.mxu0 %v783
      %919 = vmatpush.bf16.msra.mxu0 %v781
      %920 = vmatpush.bf16.msra.mxu0 %v779
      %921 = vmatmul.bf16.gmra.mxu0 %v248
      %v922 = vpop.f32.mrf.mxu0
      %v923 = vadd.f32 %v894, %v922
      %v924 = vpop.f32.mrf.mxu0
      %v925 = vadd.f32 %v896, %v924
      %926 = vmatmul.bf16.gmra.mxu0 %v250
      %v927 = vpop.f32.mrf.mxu0
      %v928 = vadd.f32 %v899, %v927
      %v929 = vpop.f32.mrf.mxu0
      %v930 = vadd.f32 %v901, %v929
      %931 = vmatmul.bf16.gmra.mxu0 %v252
      %v932 = vpop.f32.mrf.mxu0
      %v933 = vadd.f32 %v904, %v932
      %v934 = vpop.f32.mrf.mxu0
      %v935 = vadd.f32 %v906, %v934
      %936 = vmatmul.bf16.gmra.mxu0 %v254
      %v937 = vpop.f32.mrf.mxu0
      %v938 = vadd.f32 %v909, %v937
      %v939 = vpop.f32.mrf.mxu0
      %v940 = vadd.f32 %v911, %v939
      %941 = vdwg.mxu0
      %v942 = vadd.f32 %v865, %v565
      %v943 = vadd.f32 %v923, %v566
      %v944 = vadd.f32 %v867, %v565
      %v945 = vadd.f32 %v925, %v566
      %v946 = vadd.f32 %v870, %v565
      %v947 = vadd.f32 %v928, %v566
      %v948 = vadd.f32 %v872, %v565
      %v949 = vadd.f32 %v930, %v566
      %v950 = vadd.f32 %v875, %v565
      %v951 = vadd.f32 %v933, %v566
      %v952 = vadd.f32 %v877, %v565
      %v953 = vadd.f32 %v935, %v566
      %v954 = vadd.f32 %v880, %v565
      %v955 = vadd.f32 %v938, %v566
      %v956 = vadd.f32 %v882, %v565
      %v957 = vadd.f32 %v940, %v566
      %s958 = scalar_lea.vmem %s222, 16
      %v959 = vld [vmem:[%s958] sm:$0xff]
      %v960 = vld [vmem:[%s958 + $0x8] sm:$0xff]
      %v961 = vld [vmem:[%s958 + $0x20] sm:$0xff]
      %v962 = vld [vmem:[%s958 + $0x28] sm:$0xff]
      %v963 = vld [vmem:[%s958 + $0x40] sm:$0xff]
      %v964 = vld [vmem:[%s958 + $0x48] sm:$0xff]
      %v965 = vld [vmem:[%s958 + $0x60] sm:$0xff]
      %v966 = vld [vmem:[%s958 + $0x68] sm:$0xff]
      %v967 = vld [vmem:[%s958 + $0x80] sm:$0xff]
      %v968 = vld [vmem:[%s958 + $0x88] sm:$0xff]
      %v969 = vld [vmem:[%s958 + $0xa0] sm:$0xff]
      %v970 = vld [vmem:[%s958 + $0xa8] sm:$0xff]
      %v971 = vld [vmem:[%s958 + $0xc0] sm:$0xff]
      %v972 = vld [vmem:[%s958 + $0xc8] sm:$0xff]
      %v973 = vld [vmem:[%s958 + $0xe0] sm:$0xff]
      %v974 = vld [vmem:[%s958 + $0xe8] sm:$0xff]
      %v975 = vadd.f32 %v942, %v959
      %v976 = vadd.f32 %v943, %v960
      %v977 = vadd.f32 %v944, %v961
      %v978 = vadd.f32 %v945, %v962
      %v979 = vadd.f32 %v946, %v963
      %v980 = vadd.f32 %v947, %v964
      %v981 = vadd.f32 %v948, %v965
      %v982 = vadd.f32 %v949, %v966
      %v983 = vadd.f32 %v950, %v967
      %v984 = vadd.f32 %v951, %v968
      %v985 = vadd.f32 %v952, %v969
      %v986 = vadd.f32 %v953, %v970
      %v987 = vadd.f32 %v954, %v971
      %v988 = vadd.f32 %v955, %v972
      %v989 = vadd.f32 %v956, %v973
      %v990 = vadd.f32 %v957, %v974
      %s991 = scalar_lea.vmem %s229, 16
      %992 = vst [vmem:[%s991] sm:$0xff] %v975
      %993 = vst [vmem:[%s991 + $0x8] sm:$0xff] %v976
      %994 = vst [vmem:[%s991 + $0x20] sm:$0xff] %v977
      %995 = vst [vmem:[%s991 + $0x28] sm:$0xff] %v978
      %996 = vst [vmem:[%s991 + $0x40] sm:$0xff] %v979
      %997 = vst [vmem:[%s991 + $0x48] sm:$0xff] %v980
      %998 = vst [vmem:[%s991 + $0x60] sm:$0xff] %v981
      %999 = vst [vmem:[%s991 + $0x68] sm:$0xff] %v982
      %1000 = vst [vmem:[%s991 + $0x80] sm:$0xff] %v983
      %1001 = vst [vmem:[%s991 + $0x88] sm:$0xff] %v984
      %1002 = vst [vmem:[%s991 + $0xa0] sm:$0xff] %v985
      %1003 = vst [vmem:[%s991 + $0xa8] sm:$0xff] %v986
      %1004 = vst [vmem:[%s991 + $0xc0] sm:$0xff] %v987
      %1005 = vst [vmem:[%s991 + $0xc8] sm:$0xff] %v988
      %1006 = vst [vmem:[%s991 + $0xe0] sm:$0xff] %v989
      %1007 = vst [vmem:[%s991 + $0xe8] sm:$0xff] %v990
      %s1008 = smul.u32 8, %s15
      %p1009 = scmp.lt.s32.totalorder %s1008, 15
      %s1010 = scalar_select %p1009, %s1008, 15
      %s1011 = smul.addr %s1010, 4
      %s1012 = smul.addr %s1011, 8
      %s1013 = scalar_lea.vmem %s4, %s1012
      // Predicated region
      $region37: #{up_forward.1} parent=35 // pred_check
        %p1014 = pneg %p127
      $region38: #{up_forward.1} parent=35 // pred_check_branch
        %1016 = sbr.rel (%p1014) target = $region40
      $region39: #{up_forward.1} parent=35 // pred_region
        %s1017 = smul.u32 8, %s15
      $region40: #{up_forward.1} parent=35 // pred_fallthru
        _
    $region36: #{up_forward.1} parent=5 // pred_fallthru
      _
    %p1018 = scmp.le.s32.totalorder 2, %s10
    // Predicated region
    $region41: #{up_forward.1} parent=5 // pred_check
      %p1019 = pneg %p1018
    $region42: #{up_forward.1} parent=5 // pred_check_branch
      %1021 = sbr.rel (%p1019) target = $region44
    $region43: #{up_forward.1} parent=5 // pred_region
      %s1022 = ssub.s32 %s10, 2
      // Predicated region
      $region45: #{up_forward.1} parent=43 // pred_check
        %p1023 = pneg %p133
      $region46: #{up_forward.1} parent=43 // pred_check_branch
        %1025 = sbr.rel (%p1023) target = $region48
      $region47: #{up_forward.1} parent=43 // pred_region
        %s1026 = smul.u32 8, %s16
        %p1027 = scmp.lt.s32.totalorder %s1026, 15
        %s1028 = scalar_select %p1027, %s1026, 15
        %s1029 = smul.addr %s1028, 4
        %s1030 = smul.addr %s1029, 8
        %s1031 = scalar_lea.vmem %s4, %s1030
      $region48: #{up_forward.1} parent=43 // pred_fallthru
        _
    $region44: #{up_forward.1} parent=5 // pred_fallthru
      _
  $region6: #{up_forward.1} parent=0 // loop_footer
    %s14 = sadd.s32 1, %s10
  $region7: #{up_forward.1} parent=0 // loop_footer_branch
    %9 = sbr.rel target = $region3
  $region8: #{up_forward.1} parent=0 // loop_exit
    _

</llo_original>
